<compile_context>
chip_gen: v7x
topology: tpu7x:2x2x1
jax: 0.10.0
libtpu: 0.0.40
codegen_flags: <defaults>
</compile_context>

<pallas_src>
import numpy as np

import jax
import jax.numpy as jnp
from jax.experimental import pallas as pl
from jax.experimental.pallas import tpu as pltpu


# ----------------------------------------------------------------------------
# Single fused Pallas kernel: the entire netD_v1 forward pass.
#   h = LeakyReLU(bf16(h) @ W_l(bf16) + b_l)  for l = 1..4   (MXU, f32 accumulate)
#   out = sum(h * w_lin, -1) + b_lin                          (VPU mul + XLU reduce)
# ----------------------------------------------------------------------------
def _netd_fused_kernel(x_ref, w1_ref, b1_ref, w2_ref, b2_ref, w3_ref, b3_ref,
                       w4_ref, b4_ref, wl_ref, bl_ref, o_ref):
    def conv_layer(h, w_ref, b_ref):
        # bf16 x bf16 -> f32 accumulation: native MXU rate + halved weight DMA.
        acc = jnp.dot(h.astype(jnp.bfloat16), w_ref[...],
                      preferred_element_type=jnp.float32)
        acc = acc + b_ref[...]                          # (1, N) f32 broadcast over rows
        return jnp.where(acc >= 0.0, acc, 0.01 * acc)   # nn.LeakyReLU default slope

    h = x_ref[...].astype(jnp.float32)
    h = conv_layer(h, w1_ref, b1_ref)
    h = conv_layer(h, w2_ref, b2_ref)
    h = conv_layer(h, w3_ref, b3_ref)
    h = conv_layer(h, w4_ref, b4_ref)
    # Linear head (out_features=1): elementwise mul (VPU) + lane reduction (XLU) in f32
    # instead of an N=1 MXU matmul / an extra pallas_call.
    out = jnp.sum(h * wl_ref[...], axis=-1, keepdims=True) + bl_ref[...]
    o_ref[...] = out.astype(o_ref.dtype)


_MAX_BATCH_TILE = 256                       # v5e-safe cap (256-512 viable on v6e/v7x)
_SCOPED_VMEM_BUDGET = 32 * 1024 * 1024      # tightest default scoped VMEM (v7x, per TC)


def netd_v1_forward(dense_params, x_nchw):
    """x_nchw: (bs, Cin, H, W) float32 -> (bs, 1) float32."""
    (w1, b1), (w2, b2), (w3, b3), (w4, b4), (wl, bl) = dense_params
    bs = x_nchw.shape[0]
    k0 = w1.shape[0]
    # NCHW flatten; the layer-1 dense matrix was built to expect exactly this order,
    # so no host-side transpose is needed.
    x_flat = x_nchw.reshape(bs, k0)

    # Batch is the only grid axis ("parallel").  For bs > _MAX_BATCH_TILE the grid has
    # >= 2 steps, which lets megacore (v7x, 2 TCs) shard the batch.  Ragged final
    # blocks are safe: rows are independent and OOB output rows are discarded.
    tb = bs if bs <= _MAX_BATCH_TILE else _MAX_BATCH_TILE
    grid = (pl.cdiv(bs, tb),)

    def batch_map(i):
        return (i, 0)

    def const_map(i):
        return (0, 0)

    weights = [w1, b1, w2, b2, w3, b3, w4, b4, wl, bl]

    def nbytes(a):
        return int(a.size) * a.dtype.itemsize

    weight_bytes = sum(nbytes(a) for a in weights)
    in_tile_bytes = tb * k0 * x_flat.dtype.itemsize
    out_tile_bytes = tb * x_flat.dtype.itemsize
    # Double-buffered pipeline operands + headroom for the live f32/bf16 activations.
    est_vmem = 2 * (in_tile_bytes + weight_bytes + out_tile_bytes) + 3 * in_tile_bytes
    assert est_vmem <= _SCOPED_VMEM_BUDGET, (
        f"fused netD_v1 kernel needs ~{est_vmem} B of VMEM > {_SCOPED_VMEM_BUDGET} B "
        "scoped budget; shrink the batch tile or move layer 1 off the dense-fold path")

    flops = 2 * bs * sum(int(w.shape[0]) * int(w.shape[1]) for w, _ in dense_params)
    bytes_accessed = (bs * k0 * x_flat.dtype.itemsize   # input
                      + weight_bytes                    # weights (DMA'd once per call)
                      + bs * x_flat.dtype.itemsize)     # output

    return pl.pallas_call(
        _netd_fused_kernel,
        out_shape=jax.ShapeDtypeStruct((bs, 1), x_flat.dtype),
        grid=grid,
        in_specs=[pl.BlockSpec((tb, k0), batch_map)]
                 + [pl.BlockSpec(a.shape, const_map) for a in weights],
        out_specs=pl.BlockSpec((tb, 1), batch_map),
        compiler_params=pltpu.CompilerParams(
            dimension_semantics=("parallel",),
            vmem_limit_bytes=_SCOPED_VMEM_BUDGET,
        ),
        cost_estimate=pl.CostEstimate(
            flops=flops, transcendentals=0, bytes_accessed=bytes_accessed),
    )(x_flat, *weights)


# ----------------------------------------------------------------------------
# One-time host-side weight preparation (init-time glue, not per-forward work)
# ----------------------------------------------------------------------------
def _conv4s2p1_to_dense(w_oihw, H, W, in_order):
    """Fold Conv2d(kernel=4, stride=2, padding=1) into a dense matrix.

    Returns (M, Ho, Wo) with M of shape (H*W*Cin, Ho*Wo*Cout) such that
    (x_flat @ M)[n, (ho*Wo + wo)*Cout + co] is the conv output at (ho, wo, co).
    `in_order` selects how x_flat flattens the input image:
        "chw": (ci, h, w)  -- matches x_nchw.reshape(bs, -1)   (layer 1)
        "hwc": (h, w, ci)  -- matches this kernel's own activation layout
    """
    Cout, Cin, KH, KW = w_oihw.shape
    stride, pad = 2, 1
    Ho = (H + 2 * pad - KH) // stride + 1
    Wo = (W + 2 * pad - KW) // stride + 1
    w = np.asarray(w_oihw, dtype=np.float32)
    dense = np.zeros((H * W * Cin, Ho * Wo * Cout), dtype=np.float32)
    for ho in range(Ho):
        for wo in range(Wo):
            col0 = (ho * Wo + wo) * Cout
            for kh in range(KH):
                h = stride * ho + kh - pad
                if h < 0 or h >= H:
                    continue
                for kw in range(KW):
                    w_in = stride * wo + kw - pad
                    if w_in < 0 or w_in >= W:
                        continue
                    for ci in range(Cin):
                        if in_order == "chw":
                            row = (ci * H + h) * W + w_in
                        else:
                            row = (h * W + w_in) * Cin + ci
                        dense[row, col0:col0 + Cout] = w[:, ci, kh, kw]
    return dense, Ho, Wo


def prepare_dense_params(params, c_in, res):
    """Fold every conv's im2col + weights into dense matmul operands (bf16) and permute
    the linear head to the kernel's (h, w, c) activation layout (f32)."""
    dense = []
    H = W = res
    cout = c_in
    for idx, (w, b) in enumerate(params["convs"]):
        in_order = "chw" if idx == 0 else "hwc"
        mat, Ho, Wo = _conv4s2p1_to_dense(np.asarray(w), H, W, in_order)
        cout = int(w.shape[0])
        b_exp = np.tile(np.asarray(b, dtype=np.float32), Ho * Wo)[None, :]
        # Conv matrices in bf16 (halved HBM traffic, native MXU rate); biases stay f32
        # and are added to the f32 accumulator.
        dense.append((jnp.asarray(mat, dtype=jnp.bfloat16), jnp.asarray(b_exp)))
        H, W = Ho, Wo
    # Linear head: PyTorch flattens the last activation as (c, h, w); ours is
    # (h, w, c) -> permute columns once here instead of transposing at runtime.
    wl = np.asarray(params["linear_w"], dtype=np.float32).reshape(cout, H, W)
    wl = np.transpose(wl, (1, 2, 0)).reshape(1, -1)
    bl = np.asarray(params["linear_b"], dtype=np.float32).reshape(1, 1)
    dense.append((jnp.asarray(wl), jnp.asarray(bl)))
    return dense


# ----------------------------------------------------------------------------
# Parameter init (deterministic, PyTorch-like uniform(-1/sqrt(fan_in), +))
# ----------------------------------------------------------------------------
def init_params(param, key):
    dim = param["n_features"]
    nf_in = param["c_in"]
    res = param["res"]
    n_conv = 4

    chans = [nf_in, dim, 2 * dim, 4 * dim, 8 * dim]
    params = {"convs": []}
    for i in range(n_conv):
        cin, cout = chans[i], chans[i + 1]
        bound = 1.0 / float(np.sqrt(cin * 4 * 4))
        key, kw_, kb_ = jax.random.split(key, 3)
        w = jax.random.uniform(kw_, (cout, cin, 4, 4), jnp.float32, -bound, bound)
        b = jax.random.uniform(kb_, (cout,), jnp.float32, -bound, bound)
        params["convs"].append((w, b))

    c_in_lin = int(8 * dim * res * res / 4 ** n_conv)
    bound = 1.0 / float(np.sqrt(c_in_lin))
    key, kw_, kb_ = jax.random.split(key, 3)
    params["linear_w"] = jax.random.uniform(kw_, (1, c_in_lin), jnp.float32, -bound, bound)
    params["linear_b"] = jax.random.uniform(kb_, (1,), jnp.float32, -bound, bound)
    return params


# ----------------------------------------------------------------------------
# Pure-JAX reference (validation only; mirrors netD_v1.forward in full f32)
# ----------------------------------------------------------------------------
def netd_v1_reference(params, x_nchw):
    x = x_nchw
    for (w, b) in params["convs"]:
        x = jax.lax.conv_general_dilated(
            x, w, window_strides=(2, 2), padding=((1, 1), (1, 1)),
            dimension_numbers=("NCHW", "OIHW", "NCHW"),
            precision=jax.lax.Precision.HIGHEST)
        x = x + b[None, :, None, None]
        x = jnp.where(x >= 0.0, x, 0.01 * x)
    x = x.reshape(x.shape[0], -1)
    return jnp.dot(x, params["linear_w"].T,
                   precision=jax.lax.Precision.HIGHEST) + params["linear_b"]


if __name__ == "__main__":
    param = {
        "n_features": 4,                 # dim
        "c_in": 4,                       # nf_in
        "non_linearity": "leaky_relu",   # blocks hard-code LeakyReLU in the spec
        "res": 16,
    }
    key = jax.random.PRNGKey(0)
    key, kx = jax.random.split(key)
    params = init_params(param, key)
    dense_params = prepare_dense_params(params, param["c_in"], param["res"])

    x = jax.random.normal(kx, (2, param["c_in"], param["res"], param["res"]),
                          dtype=jnp.float32)

    fwd = jax.jit(netd_v1_forward)
    out = fwd(dense_params, x)
    jax.block_until_ready(out)
    assert out.shape == (2, 1), out.shape

    # Reference is full-f32 (HIGHEST) conv; the kernel intentionally uses bf16 weights
    # and bf16 matmul inputs with f32 accumulation, so tolerances reflect bf16 rounding
    # accumulated over 4 layers (real layout / fold bugs produce O(1) relative errors).
    ref = netd_v1_reference(params, x)
    np.testing.assert_allclose(np.asarray(out), np.asarray(ref),
                               rtol=1e-1, atol=5e-3)
    print("KERNEL_OK")
</pallas_src>

<mosaic_0001>
module attributes {stable_mosaic.version = 11 : i64} {
  func.func @_netd_fused_kernel(%arg0: i32, %arg1: memref<2x1024xf32, #tpu.memory_space<vmem>>, %arg2: memref<1024x256xbf16, #tpu.memory_space<vmem>>, %arg3: memref<1x256xf32, #tpu.memory_space<vmem>>, %arg4: memref<256x128xbf16, #tpu.memory_space<vmem>>, %arg5: memref<1x128xf32, #tpu.memory_space<vmem>>, %arg6: memref<128x64xbf16, #tpu.memory_space<vmem>>, %arg7: memref<1x64xf32, #tpu.memory_space<vmem>>, %arg8: memref<64x32xbf16, #tpu.memory_space<vmem>>, %arg9: memref<1x32xf32, #tpu.memory_space<vmem>>, %arg10: memref<1x32xf32, #tpu.memory_space<vmem>>, %arg11: memref<1x1xf32, #tpu.memory_space<vmem>>, %arg12: memref<2x1xf32, #tpu.memory_space<vmem>>) attributes {dimension_semantics = [#tpu.dimension_semantics<parallel>], iteration_bounds = array<i64: 1>, scalar_prefetch = 0 : i64, scratch_operands = 0 : i64, tpu.core_type = #tpu.core_type<tc>, window_params = [{transform_indices = @transform_0, window_bounds = array<i64: 2, 1024>}, {pipeline_mode = #tpu.pipeline_mode<synchronous>, transform_indices = @transform_1, window_bounds = array<i64: 1024, 256>}, {pipeline_mode = #tpu.pipeline_mode<synchronous>, transform_indices = @transform_2, window_bounds = array<i64: 1, 256>}, {pipeline_mode = #tpu.pipeline_mode<synchronous>, transform_indices = @transform_3, window_bounds = array<i64: 256, 128>}, {pipeline_mode = #tpu.pipeline_mode<synchronous>, transform_indices = @transform_4, window_bounds = array<i64: 1, 128>}, {pipeline_mode = #tpu.pipeline_mode<synchronous>, transform_indices = @transform_5, window_bounds = array<i64: 128, 64>}, {pipeline_mode = #tpu.pipeline_mode<synchronous>, transform_indices = @transform_6, window_bounds = array<i64: 1, 64>}, {pipeline_mode = #tpu.pipeline_mode<synchronous>, transform_indices = @transform_7, window_bounds = array<i64: 64, 32>}, {pipeline_mode = #tpu.pipeline_mode<synchronous>, transform_indices = @transform_8, window_bounds = array<i64: 1, 32>}, {pipeline_mode = #tpu.pipeline_mode<synchronous>, transform_indices = @transform_9, window_bounds = array<i64: 1, 32>}, {pipeline_mode = #tpu.pipeline_mode<synchronous>, transform_indices = @transform_10, window_bounds = array<i64: 1, 1>}, {transform_indices = @transform_11, window_bounds = array<i64: 2, 1>}]} {
    %c0 = arith.constant 0 : index
    %c0_0 = arith.constant 0 : index
    %0 = vector.load %arg1[%c0, %c0_0] : memref<2x1024xf32, #tpu.memory_space<vmem>>, vector<2x1024xf32>
    %1 = arith.truncf %0 : vector<2x1024xf32> to vector<2x1024xbf16>
    %c0_1 = arith.constant 0 : index
    %c0_2 = arith.constant 0 : index
    %2 = vector.load %arg2[%c0_1, %c0_2] : memref<1024x256xbf16, #tpu.memory_space<vmem>>, vector<1024x256xbf16>
    %cst = arith.constant dense<0.000000e+00> : vector<2x256xf32>
    %3 = tpu.matmul %1, %2, %cst {dimension_numbers = #tpu.dot_dimension_numbers<[1], [0], [0], [1], [0, 0, 1, 1], [], []>} : vector<2x1024xbf16>, vector<1024x256xbf16>, vector<2x256xf32> -> vector<2x256xf32>
    %c0_3 = arith.constant 0 : index
    %c0_4 = arith.constant 0 : index
    %4 = vector.load %arg3[%c0_3, %c0_4] : memref<1x256xf32, #tpu.memory_space<vmem>>, vector<1x256xf32>
    %5 = vector.broadcast %4 : vector<1x256xf32> to vector<2x256xf32>
    %6 = arith.addf %3, %5 : vector<2x256xf32>
    %cst_5 = arith.constant 0.000000e+00 : f32
    %7 = vector.broadcast %cst_5 : f32 to vector<2x256xf32>
    %8 = arith.cmpf oge, %6, %7 : vector<2x256xf32>
    %cst_6 = arith.constant 0.00999999977 : f32
    %9 = vector.broadcast %cst_6 : f32 to vector<2x256xf32>
    %10 = arith.mulf %9, %6 : vector<2x256xf32>
    %11 = arith.select %8, %6, %10 : vector<2x256xi1>, vector<2x256xf32>
    %12 = arith.truncf %11 : vector<2x256xf32> to vector<2x256xbf16>
    %c0_7 = arith.constant 0 : index
    %c0_8 = arith.constant 0 : index
    %13 = vector.load %arg4[%c0_7, %c0_8] : memref<256x128xbf16, #tpu.memory_space<vmem>>, vector<256x128xbf16>
    %cst_9 = arith.constant dense<0.000000e+00> : vector<2x128xf32>
    %14 = tpu.matmul %12, %13, %cst_9 {dimension_numbers = #tpu.dot_dimension_numbers<[1], [0], [0], [1], [0, 0, 1, 1], [], []>} : vector<2x256xbf16>, vector<256x128xbf16>, vector<2x128xf32> -> vector<2x128xf32>
    %c0_10 = arith.constant 0 : index
    %c0_11 = arith.constant 0 : index
    %15 = vector.load %arg5[%c0_10, %c0_11] : memref<1x128xf32, #tpu.memory_space<vmem>>, vector<1x128xf32>
    %16 = vector.broadcast %15 : vector<1x128xf32> to vector<2x128xf32>
    %17 = arith.addf %14, %16 : vector<2x128xf32>
    %cst_12 = arith.constant 0.000000e+00 : f32
    %18 = vector.broadcast %cst_12 : f32 to vector<2x128xf32>
    %19 = arith.cmpf oge, %17, %18 : vector<2x128xf32>
    %cst_13 = arith.constant 0.00999999977 : f32
    %20 = vector.broadcast %cst_13 : f32 to vector<2x128xf32>
    %21 = arith.mulf %20, %17 : vector<2x128xf32>
    %22 = arith.select %19, %17, %21 : vector<2x128xi1>, vector<2x128xf32>
    %23 = arith.truncf %22 : vector<2x128xf32> to vector<2x128xbf16>
    %c0_14 = arith.constant 0 : index
    %c0_15 = arith.constant 0 : index
    %24 = vector.load %arg6[%c0_14, %c0_15] : memref<128x64xbf16, #tpu.memory_space<vmem>>, vector<128x64xbf16>
    %cst_16 = arith.constant dense<0.000000e+00> : vector<2x64xf32>
    %25 = tpu.matmul %23, %24, %cst_16 {dimension_numbers = #tpu.dot_dimension_numbers<[1], [0], [0], [1], [0, 0, 1, 1], [], []>} : vector<2x128xbf16>, vector<128x64xbf16>, vector<2x64xf32> -> vector<2x64xf32>
    %c0_17 = arith.constant 0 : index
    %c0_18 = arith.constant 0 : index
    %26 = vector.load %arg7[%c0_17, %c0_18] : memref<1x64xf32, #tpu.memory_space<vmem>>, vector<1x64xf32>
    %27 = vector.broadcast %26 : vector<1x64xf32> to vector<2x64xf32>
    %28 = arith.addf %25, %27 : vector<2x64xf32>
    %cst_19 = arith.constant 0.000000e+00 : f32
    %29 = vector.broadcast %cst_19 : f32 to vector<2x64xf32>
    %30 = arith.cmpf oge, %28, %29 : vector<2x64xf32>
    %cst_20 = arith.constant 0.00999999977 : f32
    %31 = vector.broadcast %cst_20 : f32 to vector<2x64xf32>
    %32 = arith.mulf %31, %28 : vector<2x64xf32>
    %33 = arith.select %30, %28, %32 : vector<2x64xi1>, vector<2x64xf32>
    %34 = arith.truncf %33 : vector<2x64xf32> to vector<2x64xbf16>
    %c0_21 = arith.constant 0 : index
    %c0_22 = arith.constant 0 : index
    %35 = vector.load %arg8[%c0_21, %c0_22] : memref<64x32xbf16, #tpu.memory_space<vmem>>, vector<64x32xbf16>
    %cst_23 = arith.constant dense<0.000000e+00> : vector<2x32xf32>
    %36 = tpu.matmul %34, %35, %cst_23 {dimension_numbers = #tpu.dot_dimension_numbers<[1], [0], [0], [1], [0, 0, 1, 1], [], []>} : vector<2x64xbf16>, vector<64x32xbf16>, vector<2x32xf32> -> vector<2x32xf32>
    %c0_24 = arith.constant 0 : index
    %c0_25 = arith.constant 0 : index
    %37 = vector.load %arg9[%c0_24, %c0_25] : memref<1x32xf32, #tpu.memory_space<vmem>>, vector<1x32xf32>
    %38 = vector.broadcast %37 : vector<1x32xf32> to vector<2x32xf32>
    %39 = arith.addf %36, %38 : vector<2x32xf32>
    %cst_26 = arith.constant 0.000000e+00 : f32
    %40 = vector.broadcast %cst_26 : f32 to vector<2x32xf32>
    %41 = arith.cmpf oge, %39, %40 : vector<2x32xf32>
    %cst_27 = arith.constant 0.00999999977 : f32
    %42 = vector.broadcast %cst_27 : f32 to vector<2x32xf32>
    %43 = arith.mulf %42, %39 : vector<2x32xf32>
    %44 = arith.select %41, %39, %43 : vector<2x32xi1>, vector<2x32xf32>
    %c0_28 = arith.constant 0 : index
    %c0_29 = arith.constant 0 : index
    %45 = vector.load %arg10[%c0_28, %c0_29] : memref<1x32xf32, #tpu.memory_space<vmem>>, vector<1x32xf32>
    %46 = vector.broadcast %45 : vector<1x32xf32> to vector<2x32xf32>
    %47 = arith.mulf %44, %46 : vector<2x32xf32>
    %cst_30 = arith.constant dense<0.000000e+00> : vector<2xf32>
    %48 = vector.multi_reduction <add>, %47, %cst_30 [1] : vector<2x32xf32> to vector<2xf32>
    %49 = vector.shape_cast %48 : vector<2xf32> to vector<2x1xf32>
    %c0_31 = arith.constant 0 : index
    %c0_32 = arith.constant 0 : index
    %50 = vector.load %arg11[%c0_31, %c0_32] : memref<1x1xf32, #tpu.memory_space<vmem>>, vector<1x1xf32>
    %51 = vector.broadcast %50 : vector<1x1xf32> to vector<2x1xf32>
    %52 = arith.addf %49, %51 : vector<2x1xf32>
    %c0_33 = arith.constant 0 : index
    %c0_34 = arith.constant 0 : index
    %53 = vector.load %arg12[%c0_33, %c0_34] : memref<2x1xf32, #tpu.memory_space<vmem>>, vector<2x1xf32>
    tpu.vector_store %arg12[%c0_33, %c0_34], %52 {strides = array<i32>} : memref<2x1xf32, #tpu.memory_space<vmem>>, vector<2x1xf32>,
    return
  }
  func.func @transform_0(%arg0: i32) -> (i32, i32) {
    %c0_i32 = arith.constant 0 : i32
    %c0_i32_0 = arith.constant 0 : i32
    return %arg0, %c0_i32 : i32, i32
  }
  func.func @transform_1(%arg0: i32) -> (i32, i32) {
    %c0_i32 = arith.constant 0 : i32
    %c0_i32_0 = arith.constant 0 : i32
    %c0_i32_1 = arith.constant 0 : i32
    return %c0_i32, %c0_i32_0 : i32, i32
  }
  func.func @transform_2(%arg0: i32) -> (i32, i32) {
    %c0_i32 = arith.constant 0 : i32
    %c0_i32_0 = arith.constant 0 : i32
    %c0_i32_1 = arith.constant 0 : i32
    return %c0_i32, %c0_i32_0 : i32, i32
  }
  func.func @transform_3(%arg0: i32) -> (i32, i32) {
    %c0_i32 = arith.constant 0 : i32
    %c0_i32_0 = arith.constant 0 : i32
    %c0_i32_1 = arith.constant 0 : i32
    return %c0_i32, %c0_i32_0 : i32, i32
  }
  func.func @transform_4(%arg0: i32) -> (i32, i32) {
    %c0_i32 = arith.constant 0 : i32
    %c0_i32_0 = arith.constant 0 : i32
    %c0_i32_1 = arith.constant 0 : i32
    return %c0_i32, %c0_i32_0 : i32, i32
  }
  func.func @transform_5(%arg0: i32) -> (i32, i32) {
    %c0_i32 = arith.constant 0 : i32
    %c0_i32_0 = arith.constant 0 : i32
    %c0_i32_1 = arith.constant 0 : i32
    return %c0_i32, %c0_i32_0 : i32, i32
  }
  func.func @transform_6(%arg0: i32) -> (i32, i32) {
    %c0_i32 = arith.constant 0 : i32
    %c0_i32_0 = arith.constant 0 : i32
    %c0_i32_1 = arith.constant 0 : i32
    return %c0_i32, %c0_i32_0 : i32, i32
  }
  func.func @transform_7(%arg0: i32) -> (i32, i32) {
    %c0_i32 = arith.constant 0 : i32
    %c0_i32_0 = arith.constant 0 : i32
    %c0_i32_1 = arith.constant 0 : i32
    return %c0_i32, %c0_i32_0 : i32, i32
  }
  func.func @transform_8(%arg0: i32) -> (i32, i32) {
    %c0_i32 = arith.constant 0 : i32
    %c0_i32_0 = arith.constant 0 : i32
    %c0_i32_1 = arith.constant 0 : i32
    return %c0_i32, %c0_i32_0 : i32, i32
  }
  func.func @transform_9(%arg0: i32) -> (i32, i32) {
    %c0_i32 = arith.constant 0 : i32
    %c0_i32_0 = arith.constant 0 : i32
    %c0_i32_1 = arith.constant 0 : i32
    return %c0_i32, %c0_i32_0 : i32, i32
  }
  func.func @transform_10(%arg0: i32) -> (i32, i32) {
    %c0_i32 = arith.constant 0 : i32
    %c0_i32_0 = arith.constant 0 : i32
    %c0_i32_1 = arith.constant 0 : i32
    return %c0_i32, %c0_i32_0 : i32, i32
  }
  func.func @transform_11(%arg0: i32) -> (i32, i32) {
    %c0_i32 = arith.constant 0 : i32
    %c0_i32_0 = arith.constant 0 : i32
    return %arg0, %c0_i32 : i32, i32
  }
}

</mosaic_0001>

<llo_original>
// kernel: netd_v1_forward.1
$region0: #{netd_v1_forward.1}
  #allocation0 [shape = 'u32[]', space=smem, size = 0x4, offset = 0x4, fixed_abs, tag = 'smem constant byte address 0x4 - core index']
  #allocation1 [shape = 'u32[144,128]{1,0:T(1,128)}', space=vmem, size = 0x12000, scoped, tag = 'internal scratch']
  #allocation2 [shape = 'f32[1,1]{1,0:T(1,128)S(1)}', space=vmem, size = 0x200, scoped, tag = 'scoped memory for netd_v1_forward.1']
  %s0 = inlined_call_operand.vmem [shape: f32[2,1024], index: 0, kind: input, shape index: {}]
  %s1 = inlined_call_operand.hbm [shape: bf16[1024,256], index: 1, kind: input, shape index: {}]
  %s2 = inlined_call_operand.vmem [shape: f32[1,256], index: 2, kind: input, shape index: {}]
  %s3 = inlined_call_operand.vmem [shape: bf16[256,128], index: 3, kind: input, shape index: {}]
  %s4 = inlined_call_operand.vmem [shape: f32[1,128], index: 4, kind: input, shape index: {}]
  %s5 = inlined_call_operand.vmem [shape: bf16[128,64], index: 5, kind: input, shape index: {}]
  %s6 = inlined_call_operand.vmem [shape: f32[1,64], index: 6, kind: input, shape index: {}]
  %s7 = inlined_call_operand.vmem [shape: bf16[64,32], index: 7, kind: input, shape index: {}]
  %s8 = inlined_call_operand.vmem [shape: f32[1,32], index: 8, kind: input, shape index: {}]
  %s9 = inlined_call_operand.vmem [shape: f32[1,32], index: 9, kind: input, shape index: {}]
  %s10 = inlined_call_operand.<no memory space> [shape: f32[1,1], index: 10, kind: input, shape index: {}]
  %s11 = inlined_call_operand.vmem [shape: f32[2,1], index: 11, kind: output, shape index: {}]
  %s12 = sld [smem:[#allocation0]]
  $region58: #{netd_v1_forward.1} parent=0
    _
  %s14 = ssub.s32 1, %s12
  %s15 = scalar_select 0, %s14, %s12
  %v16 = vstv %s10
  %17 = vst [vmem:[#allocation2] sm:$0x1] %v16
  $region1: #{netd_v1_forward.1} parent=0
    #allocation3 [shape = 'u8[524288]{0}', space=vmem, size = 0x80000, scoped, tag = 'input window, operand 1, single buffered']
    #allocation4 [shape = 's32[1]{0}', space=sflag, size = 0x4, scoped, tag = 'scoped memory for netd_v1_forward.1']
    %18 = vsyncpa [#allocation4], 0
    // Predicated region
    $region2: #{netd_v1_forward.1} parent=1 // pred_check
      _
    $region3: #{netd_v1_forward.1} parent=1 // pred_check_branch
      %20 = sbr.rel (0) target = $region5
    $region4: #{netd_v1_forward.1} parent=1 // pred_region
      _
    $region5: #{netd_v1_forward.1} parent=1 // pred_fallthru
      _
    // Predicated region
    $region6: #{netd_v1_forward.1} parent=1 // pred_check
      _
    $region7: #{netd_v1_forward.1} parent=1 // pred_check_branch
      %22 = sbr.rel (0) target = $region9
    $region8: #{netd_v1_forward.1} parent=1 // pred_region
      %s24 = ssub.s32 16384, 16384
      %25 = vsyncadd [#allocation4], %s24
      %s26 = sshll.u32 [#allocation3], 4
      %s27 = int_to_ptr.vmem [resolvable:$true] %s26
      %32 = dma.hbm_to_vmem [thread:$0]  %s1, 16384, %s27, [#allocation4], 128, 128, 8
    $region9: #{netd_v1_forward.1} parent=1 // pred_fallthru
      _
    // Predicated region
    $region10: #{netd_v1_forward.1} parent=1 // pred_check
      _
    $region11: #{netd_v1_forward.1} parent=1 // pred_check_branch
      %34 = sbr.rel (0) target = $region13
    $region12: #{netd_v1_forward.1} parent=1 // pred_region
      _
    $region13: #{netd_v1_forward.1} parent=1 // pred_fallthru
      _
    // Predicated region
    $region14: #{netd_v1_forward.1} parent=1 // pred_check
      _
    $region15: #{netd_v1_forward.1} parent=1 // pred_check_branch
      %36 = sbr.rel (0) target = $region17
    $region16: #{netd_v1_forward.1} parent=1 // pred_region
      _
    $region17: #{netd_v1_forward.1} parent=1 // pred_fallthru
      _
    // Predicated region
    $region18: #{netd_v1_forward.1} parent=1 // pred_check
      _
    $region19: #{netd_v1_forward.1} parent=1 // pred_check_branch
      %38 = sbr.rel (0) target = $region21
    $region20: #{netd_v1_forward.1} parent=1 // pred_region
      _
    $region21: #{netd_v1_forward.1} parent=1 // pred_fallthru
      _
    // Predicated region
    $region22: #{netd_v1_forward.1} parent=1 // pred_check
      _
    $region23: #{netd_v1_forward.1} parent=1 // pred_check_branch
      %40 = sbr.rel (0) target = $region25
    $region24: #{netd_v1_forward.1} parent=1 // pred_region
      _
    $region25: #{netd_v1_forward.1} parent=1 // pred_fallthru
      _
    // Predicated region
    $region26: #{netd_v1_forward.1} parent=1 // pred_check
      _
    $region27: #{netd_v1_forward.1} parent=1 // pred_check_branch
      %42 = sbr.rel (0) target = $region29
    $region28: #{netd_v1_forward.1} parent=1 // pred_region
      _
    $region29: #{netd_v1_forward.1} parent=1 // pred_fallthru
      _
    // Predicated region
    $region30: #{netd_v1_forward.1} parent=1 // pred_check
      _
    $region31: #{netd_v1_forward.1} parent=1 // pred_check_branch
      %44 = sbr.rel (0) target = $region33
    $region32: #{netd_v1_forward.1} parent=1 // pred_region
      _
    $region33: #{netd_v1_forward.1} parent=1 // pred_fallthru
      _
    // Predicated region
    $region34: #{netd_v1_forward.1} parent=1 // pred_check
      _
    $region35: #{netd_v1_forward.1} parent=1 // pred_check_branch
      %46 = sbr.rel (0) target = $region37
    $region36: #{netd_v1_forward.1} parent=1 // pred_region
      _
    $region37: #{netd_v1_forward.1} parent=1 // pred_fallthru
      _
    // Predicated region
    $region38: #{netd_v1_forward.1} parent=1 // pred_check
      _
    $region39: #{netd_v1_forward.1} parent=1 // pred_check_branch
      %48 = sbr.rel (0) target = $region41
    $region40: #{netd_v1_forward.1} parent=1 // pred_region
      _
    $region41: #{netd_v1_forward.1} parent=1 // pred_fallthru
      _
    // Predicated region
    $region42: #{netd_v1_forward.1} parent=1 // pred_check
      _
    $region43: #{netd_v1_forward.1} parent=1 // pred_check_branch
      %50 = sbr.rel (0) target = $region45
    $region44: #{netd_v1_forward.1} parent=1 // pred_region
      _
    $region45: #{netd_v1_forward.1} parent=1 // pred_fallthru
      _
    // Predicated region
    $region46: #{netd_v1_forward.1} parent=1 // pred_check
      _
    $region47: #{netd_v1_forward.1} parent=1 // pred_check_branch
      %52 = sbr.rel (0) target = $region49
    $region48: #{netd_v1_forward.1} parent=1 // pred_region
      %53 = dma.done [#allocation4], 16384
    $region49: #{netd_v1_forward.1} parent=1 // pred_fallthru
      _
    %v55 = vld [vmem:[%s0] sm:$0xff]
    %v56 = vld [vmem:[%s0 + $0x8] sm:$0xff]
    %v59 = vcombine.high %v55, %v55
    %v61 = vunpack.c.l.s4 1983009808
    %v62 = vunpack.c.0.s8 %v61
    %v63 = vlaneseq
    %v64 = vshrl.u32 %v63, 7
    %v65 = vsub.s32 %v62, %v64
    %v66 = vrot.slane %v55, %v65
    %v68 = vunpack.c.l.s4 1983009808
    %v69 = vunpack.c.0.s8 %v68
    %v70 = vlaneseq
    %v71 = vshrl.u32 %v70, 7
    %v72 = vsub.s32 %v69, %v71
    %v73 = vrot.slane %v59, %v72
    %v74 = vcombine.high %v66, %v66
    %v75 = vcombine.high %v73, %v73
    %v76 = vcombine.high %v56, %v56
    %v78 = vunpack.c.l.s4 1983009808
    %v79 = vunpack.c.0.s8 %v78
    %v80 = vlaneseq
    %v81 = vshrl.u32 %v80, 7
    %v82 = vsub.s32 %v79, %v81
    %v83 = vrot.slane %v56, %v82
    %v85 = vunpack.c.l.s4 1983009808
    %v86 = vunpack.c.0.s8 %v85
    %v87 = vlaneseq
    %v88 = vshrl.u32 %v87, 7
    %v89 = vsub.s32 %v86, %v88
    %v90 = vrot.slane %v76, %v89
    %v91 = vcombine.high %v83, %v83
    %v92 = vcombine.high %v90, %v90
    %v101 = vpack.c.bf16 %v66, %v66
    %v102 = vpack.c.bf16 %v74, %v74
    %v103 = vpack.c.bf16 %v73, %v73
    %v104 = vpack.c.bf16 %v75, %v75
    %v105 = vpack.c.bf16 %v83, %v83
    %v106 = vpack.c.bf16 %v91, %v91
    %v107 = vpack.c.bf16 %v90, %v90
    %v108 = vpack.c.bf16 %v92, %v92
    %v109 = vld [vmem:[#allocation3] sm:$0xff]
    %v110 = vld [vmem:[#allocation3 + $0x8] sm:$0xff]
    %v111 = vld [vmem:[#allocation3 + $0x10] sm:$0xff]
    %v112 = vld [vmem:[#allocation3 + $0x18] sm:$0xff]
    %v113 = vld [vmem:[#allocation3 + $0x20] sm:$0xff]
    %v114 = vld [vmem:[#allocation3 + $0x28] sm:$0xff]
    %v115 = vld [vmem:[#allocation3 + $0x30] sm:$0xff]
    %v116 = vld [vmem:[#allocation3 + $0x38] sm:$0xff]
    %v117 = vld [vmem:[#allocation3 + $0x40] sm:$0xff]
    %v118 = vld [vmem:[#allocation3 + $0x48] sm:$0xff]
    %v119 = vld [vmem:[#allocation3 + $0x50] sm:$0xff]
    %v120 = vld [vmem:[#allocation3 + $0x58] sm:$0xff]
    %v121 = vld [vmem:[#allocation3 + $0x60] sm:$0xff]
    %v122 = vld [vmem:[#allocation3 + $0x68] sm:$0xff]
    %v123 = vld [vmem:[#allocation3 + $0x70] sm:$0xff]
    %v124 = vld [vmem:[#allocation3 + $0x78] sm:$0xff]
    %v125 = vld [vmem:[#allocation3 + $0x80] sm:$0xff]
    %v126 = vld [vmem:[#allocation3 + $0x88] sm:$0xff]
    %v127 = vld [vmem:[#allocation3 + $0x90] sm:$0xff]
    %v128 = vld [vmem:[#allocation3 + $0x98] sm:$0xff]
    %v129 = vld [vmem:[#allocation3 + $0xa0] sm:$0xff]
    %v130 = vld [vmem:[#allocation3 + $0xa8] sm:$0xff]
    %v131 = vld [vmem:[#allocation3 + $0xb0] sm:$0xff]
    %v132 = vld [vmem:[#allocation3 + $0xb8] sm:$0xff]
    %v133 = vld [vmem:[#allocation3 + $0xc0] sm:$0xff]
    %v134 = vld [vmem:[#allocation3 + $0xc8] sm:$0xff]
    %v135 = vld [vmem:[#allocation3 + $0xd0] sm:$0xff]
    %v136 = vld [vmem:[#allocation3 + $0xd8] sm:$0xff]
    %v137 = vld [vmem:[#allocation3 + $0xe0] sm:$0xff]
    %v138 = vld [vmem:[#allocation3 + $0xe8] sm:$0xff]
    %v139 = vld [vmem:[#allocation3 + $0xf0] sm:$0xff]
    %v140 = vld [vmem:[#allocation3 + $0xf8] sm:$0xff]
    %v141 = vld [vmem:[#allocation3 + $0x100] sm:$0xff]
    %v142 = vld [vmem:[#allocation3 + $0x108] sm:$0xff]
    %v143 = vld [vmem:[#allocation3 + $0x110] sm:$0xff]
    %v144 = vld [vmem:[#allocation3 + $0x118] sm:$0xff]
    %v145 = vld [vmem:[#allocation3 + $0x120] sm:$0xff]
    %v146 = vld [vmem:[#allocation3 + $0x128] sm:$0xff]
    %v147 = vld [vmem:[#allocation3 + $0x130] sm:$0xff]
    %v148 = vld [vmem:[#allocation3 + $0x138] sm:$0xff]
    %v149 = vld [vmem:[#allocation3 + $0x140] sm:$0xff]
    %v150 = vld [vmem:[#allocation3 + $0x148] sm:$0xff]
    %v151 = vld [vmem:[#allocation3 + $0x150] sm:$0xff]
    %v152 = vld [vmem:[#allocation3 + $0x158] sm:$0xff]
    %v153 = vld [vmem:[#allocation3 + $0x160] sm:$0xff]
    %v154 = vld [vmem:[#allocation3 + $0x168] sm:$0xff]
    %v155 = vld [vmem:[#allocation3 + $0x170] sm:$0xff]
    %v156 = vld [vmem:[#allocation3 + $0x178] sm:$0xff]
    %v157 = vld [vmem:[#allocation3 + $0x180] sm:$0xff]
    %v158 = vld [vmem:[#allocation3 + $0x188] sm:$0xff]
    %v159 = vld [vmem:[#allocation3 + $0x190] sm:$0xff]
    %v160 = vld [vmem:[#allocation3 + $0x198] sm:$0xff]
    %v161 = vld [vmem:[#allocation3 + $0x1a0] sm:$0xff]
    %v162 = vld [vmem:[#allocation3 + $0x1a8] sm:$0xff]
    %v163 = vld [vmem:[#allocation3 + $0x1b0] sm:$0xff]
    %v164 = vld [vmem:[#allocation3 + $0x1b8] sm:$0xff]
    %v165 = vld [vmem:[#allocation3 + $0x1c0] sm:$0xff]
    %v166 = vld [vmem:[#allocation3 + $0x1c8] sm:$0xff]
    %v167 = vld [vmem:[#allocation3 + $0x1d0] sm:$0xff]
    %v168 = vld [vmem:[#allocation3 + $0x1d8] sm:$0xff]
    %v169 = vld [vmem:[#allocation3 + $0x1e0] sm:$0xff]
    %v170 = vld [vmem:[#allocation3 + $0x1e8] sm:$0xff]
    %v171 = vld [vmem:[#allocation3 + $0x1f0] sm:$0xff]
    %v172 = vld [vmem:[#allocation3 + $0x1f8] sm:$0xff]
    %v173 = vld [vmem:[#allocation3 + $0x200] sm:$0xff]
    %v174 = vld [vmem:[#allocation3 + $0x208] sm:$0xff]
    %v175 = vld [vmem:[#allocation3 + $0x210] sm:$0xff]
    %v176 = vld [vmem:[#allocation3 + $0x218] sm:$0xff]
    %v177 = vld [vmem:[#allocation3 + $0x220] sm:$0xff]
    %v178 = vld [vmem:[#allocation3 + $0x228] sm:$0xff]
    %v179 = vld [vmem:[#allocation3 + $0x230] sm:$0xff]
    %v180 = vld [vmem:[#allocation3 + $0x238] sm:$0xff]
    %v181 = vld [vmem:[#allocation3 + $0x240] sm:$0xff]
    %v182 = vld [vmem:[#allocation3 + $0x248] sm:$0xff]
    %v183 = vld [vmem:[#allocation3 + $0x250] sm:$0xff]
    %v184 = vld [vmem:[#allocation3 + $0x258] sm:$0xff]
    %v185 = vld [vmem:[#allocation3 + $0x260] sm:$0xff]
    %v186 = vld [vmem:[#allocation3 + $0x268] sm:$0xff]
    %v187 = vld [vmem:[#allocation3 + $0x270] sm:$0xff]
    %v188 = vld [vmem:[#allocation3 + $0x278] sm:$0xff]
    %v189 = vld [vmem:[#allocation3 + $0x280] sm:$0xff]
    %v190 = vld [vmem:[#allocation3 + $0x288] sm:$0xff]
    %v191 = vld [vmem:[#allocation3 + $0x290] sm:$0xff]
    %v192 = vld [vmem:[#allocation3 + $0x298] sm:$0xff]
    %v193 = vld [vmem:[#allocation3 + $0x2a0] sm:$0xff]
    %v194 = vld [vmem:[#allocation3 + $0x2a8] sm:$0xff]
    %v195 = vld [vmem:[#allocation3 + $0x2b0] sm:$0xff]
    %v196 = vld [vmem:[#allocation3 + $0x2b8] sm:$0xff]
    %v197 = vld [vmem:[#allocation3 + $0x2c0] sm:$0xff]
    %v198 = vld [vmem:[#allocation3 + $0x2c8] sm:$0xff]
    %v199 = vld [vmem:[#allocation3 + $0x2d0] sm:$0xff]
    %v200 = vld [vmem:[#allocation3 + $0x2d8] sm:$0xff]
    %v201 = vld [vmem:[#allocation3 + $0x2e0] sm:$0xff]
    %v202 = vld [vmem:[#allocation3 + $0x2e8] sm:$0xff]
    %v203 = vld [vmem:[#allocation3 + $0x2f0] sm:$0xff]
    %v204 = vld [vmem:[#allocation3 + $0x2f8] sm:$0xff]
    %v205 = vld [vmem:[#allocation3 + $0x300] sm:$0xff]
    %v206 = vld [vmem:[#allocation3 + $0x308] sm:$0xff]
    %v207 = vld [vmem:[#allocation3 + $0x310] sm:$0xff]
    %v208 = vld [vmem:[#allocation3 + $0x318] sm:$0xff]
    %v209 = vld [vmem:[#allocation3 + $0x320] sm:$0xff]
    %v210 = vld [vmem:[#allocation3 + $0x328] sm:$0xff]
    %v211 = vld [vmem:[#allocation3 + $0x330] sm:$0xff]
    %v212 = vld [vmem:[#allocation3 + $0x338] sm:$0xff]
    %v213 = vld [vmem:[#allocation3 + $0x340] sm:$0xff]
    %v214 = vld [vmem:[#allocation3 + $0x348] sm:$0xff]
    %v215 = vld [vmem:[#allocation3 + $0x350] sm:$0xff]
    %v216 = vld [vmem:[#allocation3 + $0x358] sm:$0xff]
    %v217 = vld [vmem:[#allocation3 + $0x360] sm:$0xff]
    %v218 = vld [vmem:[#allocation3 + $0x368] sm:$0xff]
    %v219 = vld [vmem:[#allocation3 + $0x370] sm:$0xff]
    %v220 = vld [vmem:[#allocation3 + $0x378] sm:$0xff]
    %v221 = vld [vmem:[#allocation3 + $0x380] sm:$0xff]
    %v222 = vld [vmem:[#allocation3 + $0x388] sm:$0xff]
    %v223 = vld [vmem:[#allocation3 + $0x390] sm:$0xff]
    %v224 = vld [vmem:[#allocation3 + $0x398] sm:$0xff]
    %v225 = vld [vmem:[#allocation3 + $0x3a0] sm:$0xff]
    %v226 = vld [vmem:[#allocation3 + $0x3a8] sm:$0xff]
    %v227 = vld [vmem:[#allocation3 + $0x3b0] sm:$0xff]
    %v228 = vld [vmem:[#allocation3 + $0x3b8] sm:$0xff]
    %v229 = vld [vmem:[#allocation3 + $0x3c0] sm:$0xff]
    %v230 = vld [vmem:[#allocation3 + $0x3c8] sm:$0xff]
    %v231 = vld [vmem:[#allocation3 + $0x3d0] sm:$0xff]
    %v232 = vld [vmem:[#allocation3 + $0x3d8] sm:$0xff]
    %v233 = vld [vmem:[#allocation3 + $0x3e0] sm:$0xff]
    %v234 = vld [vmem:[#allocation3 + $0x3e8] sm:$0xff]
    %v235 = vld [vmem:[#allocation3 + $0x3f0] sm:$0xff]
    %v236 = vld [vmem:[#allocation3 + $0x3f8] sm:$0xff]
    %v237 = vld [vmem:[%s2] sm:$0x3]
    %v239 = vlaneseq
    %v240 = vshrl.u32 %v239, 7
    %v241 = vsub.s32 0, %v240
    %v242 = vrot.slane %v237, %v241
    %v243 = vlaneseq
    %v244 = vshrl.u32 %v243, 7
    %v245 = vsub.s32 1, %v244
    %v246 = vrot.slane %v237, %v245
    %v377 = vunpack.c.l.b16 %v109
    %v378 = vunpack.c.h.b16 %v109
    %v379 = vunpack.c.l.b16 %v110
    %v380 = vunpack.c.h.b16 %v110
    %v381 = vunpack.c.l.b16 %v111
    %v382 = vunpack.c.h.b16 %v111
    %v383 = vunpack.c.l.b16 %v112
    %v384 = vunpack.c.h.b16 %v112
    %v385 = vunpack.c.l.b16 %v113
    %v386 = vunpack.c.h.b16 %v113
    %v387 = vunpack.c.l.b16 %v114
    %v388 = vunpack.c.h.b16 %v114
    %v389 = vunpack.c.l.b16 %v115
    %v390 = vunpack.c.h.b16 %v115
    %v391 = vunpack.c.l.b16 %v116
    %v392 = vunpack.c.h.b16 %v116
    %v393 = vunpack.c.l.b16 %v117
    %v394 = vunpack.c.h.b16 %v117
    %v395 = vunpack.c.l.b16 %v118
    %v396 = vunpack.c.h.b16 %v118
    %v397 = vunpack.c.l.b16 %v119
    %v398 = vunpack.c.h.b16 %v119
    %v399 = vunpack.c.l.b16 %v120
    %v400 = vunpack.c.h.b16 %v120
    %v401 = vunpack.c.l.b16 %v121
    %v402 = vunpack.c.h.b16 %v121
    %v403 = vunpack.c.l.b16 %v122
    %v404 = vunpack.c.h.b16 %v122
    %v405 = vunpack.c.l.b16 %v123
    %v406 = vunpack.c.h.b16 %v123
    %v407 = vunpack.c.l.b16 %v124
    %v408 = vunpack.c.h.b16 %v124
    %v409 = vunpack.c.l.b16 %v125
    %v410 = vunpack.c.h.b16 %v125
    %v411 = vunpack.c.l.b16 %v126
    %v412 = vunpack.c.h.b16 %v126
    %v413 = vunpack.c.l.b16 %v127
    %v414 = vunpack.c.h.b16 %v127
    %v415 = vunpack.c.l.b16 %v128
    %v416 = vunpack.c.h.b16 %v128
    %v417 = vunpack.c.l.b16 %v129
    %v418 = vunpack.c.h.b16 %v129
    %v419 = vunpack.c.l.b16 %v130
    %v420 = vunpack.c.h.b16 %v130
    %v421 = vunpack.c.l.b16 %v131
    %v422 = vunpack.c.h.b16 %v131
    %v423 = vunpack.c.l.b16 %v132
    %v424 = vunpack.c.h.b16 %v132
    %v425 = vunpack.c.l.b16 %v133
    %v426 = vunpack.c.h.b16 %v133
    %v427 = vunpack.c.l.b16 %v134
    %v428 = vunpack.c.h.b16 %v134
    %v429 = vunpack.c.l.b16 %v135
    %v430 = vunpack.c.h.b16 %v135
    %v431 = vunpack.c.l.b16 %v136
    %v432 = vunpack.c.h.b16 %v136
    %v433 = vunpack.c.l.b16 %v137
    %v434 = vunpack.c.h.b16 %v137
    %v435 = vunpack.c.l.b16 %v138
    %v436 = vunpack.c.h.b16 %v138
    %v437 = vunpack.c.l.b16 %v139
    %v438 = vunpack.c.h.b16 %v139
    %v439 = vunpack.c.l.b16 %v140
    %v440 = vunpack.c.h.b16 %v140
    %v441 = vunpack.c.l.b16 %v141
    %v442 = vunpack.c.h.b16 %v141
    %v443 = vunpack.c.l.b16 %v142
    %v444 = vunpack.c.h.b16 %v142
    %v445 = vunpack.c.l.b16 %v143
    %v446 = vunpack.c.h.b16 %v143
    %v447 = vunpack.c.l.b16 %v144
    %v448 = vunpack.c.h.b16 %v144
    %v449 = vunpack.c.l.b16 %v145
    %v450 = vunpack.c.h.b16 %v145
    %v451 = vunpack.c.l.b16 %v146
    %v452 = vunpack.c.h.b16 %v146
    %v453 = vunpack.c.l.b16 %v147
    %v454 = vunpack.c.h.b16 %v147
    %v455 = vunpack.c.l.b16 %v148
    %v456 = vunpack.c.h.b16 %v148
    %v457 = vunpack.c.l.b16 %v149
    %v458 = vunpack.c.h.b16 %v149
    %v459 = vunpack.c.l.b16 %v150
    %v460 = vunpack.c.h.b16 %v150
    %v461 = vunpack.c.l.b16 %v151
    %v462 = vunpack.c.h.b16 %v151
    %v463 = vunpack.c.l.b16 %v152
    %v464 = vunpack.c.h.b16 %v152
    %v465 = vunpack.c.l.b16 %v153
    %v466 = vunpack.c.h.b16 %v153
    %v467 = vunpack.c.l.b16 %v154
    %v468 = vunpack.c.h.b16 %v154
    %v469 = vunpack.c.l.b16 %v155
    %v470 = vunpack.c.h.b16 %v155
    %v471 = vunpack.c.l.b16 %v156
    %v472 = vunpack.c.h.b16 %v156
    %v473 = vunpack.c.l.b16 %v157
    %v474 = vunpack.c.h.b16 %v157
    %v475 = vunpack.c.l.b16 %v158
    %v476 = vunpack.c.h.b16 %v158
    %v477 = vunpack.c.l.b16 %v159
    %v478 = vunpack.c.h.b16 %v159
    %v479 = vunpack.c.l.b16 %v160
    %v480 = vunpack.c.h.b16 %v160
    %v481 = vunpack.c.l.b16 %v161
    %v482 = vunpack.c.h.b16 %v161
    %v483 = vunpack.c.l.b16 %v162
    %v484 = vunpack.c.h.b16 %v162
    %v485 = vunpack.c.l.b16 %v163
    %v486 = vunpack.c.h.b16 %v163
    %v487 = vunpack.c.l.b16 %v164
    %v488 = vunpack.c.h.b16 %v164
    %v489 = vunpack.c.l.b16 %v165
    %v490 = vunpack.c.h.b16 %v165
    %v491 = vunpack.c.l.b16 %v166
    %v492 = vunpack.c.h.b16 %v166
    %v493 = vunpack.c.l.b16 %v167
    %v494 = vunpack.c.h.b16 %v167
    %v495 = vunpack.c.l.b16 %v168
    %v496 = vunpack.c.h.b16 %v168
    %v497 = vunpack.c.l.b16 %v169
    %v498 = vunpack.c.h.b16 %v169
    %v499 = vunpack.c.l.b16 %v170
    %v500 = vunpack.c.h.b16 %v170
    %v501 = vunpack.c.l.b16 %v171
    %v502 = vunpack.c.h.b16 %v171
    %v503 = vunpack.c.l.b16 %v172
    %v504 = vunpack.c.h.b16 %v172
    %v505 = vunpack.c.l.b16 %v173
    %v506 = vunpack.c.h.b16 %v173
    %v507 = vunpack.c.l.b16 %v174
    %v508 = vunpack.c.h.b16 %v174
    %v509 = vunpack.c.l.b16 %v175
    %v510 = vunpack.c.h.b16 %v175
    %v511 = vunpack.c.l.b16 %v176
    %v512 = vunpack.c.h.b16 %v176
    %v513 = vunpack.c.l.b16 %v177
    %v514 = vunpack.c.h.b16 %v177
    %v515 = vunpack.c.l.b16 %v178
    %v516 = vunpack.c.h.b16 %v178
    %v517 = vunpack.c.l.b16 %v179
    %v518 = vunpack.c.h.b16 %v179
    %v519 = vunpack.c.l.b16 %v180
    %v520 = vunpack.c.h.b16 %v180
    %v521 = vunpack.c.l.b16 %v181
    %v522 = vunpack.c.h.b16 %v181
    %v523 = vunpack.c.l.b16 %v182
    %v524 = vunpack.c.h.b16 %v182
    %v525 = vunpack.c.l.b16 %v183
    %v526 = vunpack.c.h.b16 %v183
    %v527 = vunpack.c.l.b16 %v184
    %v528 = vunpack.c.h.b16 %v184
    %v529 = vunpack.c.l.b16 %v185
    %v530 = vunpack.c.h.b16 %v185
    %v531 = vunpack.c.l.b16 %v186
    %v532 = vunpack.c.h.b16 %v186
    %v533 = vunpack.c.l.b16 %v187
    %v534 = vunpack.c.h.b16 %v187
    %v535 = vunpack.c.l.b16 %v188
    %v536 = vunpack.c.h.b16 %v188
    %v537 = vunpack.c.l.b16 %v189
    %v538 = vunpack.c.h.b16 %v189
    %v539 = vunpack.c.l.b16 %v190
    %v540 = vunpack.c.h.b16 %v190
    %v541 = vunpack.c.l.b16 %v191
    %v542 = vunpack.c.h.b16 %v191
    %v543 = vunpack.c.l.b16 %v192
    %v544 = vunpack.c.h.b16 %v192
    %v545 = vunpack.c.l.b16 %v193
    %v546 = vunpack.c.h.b16 %v193
    %v547 = vunpack.c.l.b16 %v194
    %v548 = vunpack.c.h.b16 %v194
    %v549 = vunpack.c.l.b16 %v195
    %v550 = vunpack.c.h.b16 %v195
    %v551 = vunpack.c.l.b16 %v196
    %v552 = vunpack.c.h.b16 %v196
    %v553 = vunpack.c.l.b16 %v197
    %v554 = vunpack.c.h.b16 %v197
    %v555 = vunpack.c.l.b16 %v198
    %v556 = vunpack.c.h.b16 %v198
    %v557 = vunpack.c.l.b16 %v199
    %v558 = vunpack.c.h.b16 %v199
    %v559 = vunpack.c.l.b16 %v200
    %v560 = vunpack.c.h.b16 %v200
    %v561 = vunpack.c.l.b16 %v201
    %v562 = vunpack.c.h.b16 %v201
    %v563 = vunpack.c.l.b16 %v202
    %v564 = vunpack.c.h.b16 %v202
    %v565 = vunpack.c.l.b16 %v203
    %v566 = vunpack.c.h.b16 %v203
    %v567 = vunpack.c.l.b16 %v204
    %v568 = vunpack.c.h.b16 %v204
    %v569 = vunpack.c.l.b16 %v205
    %v570 = vunpack.c.h.b16 %v205
    %v571 = vunpack.c.l.b16 %v206
    %v572 = vunpack.c.h.b16 %v206
    %v573 = vunpack.c.l.b16 %v207
    %v574 = vunpack.c.h.b16 %v207
    %v575 = vunpack.c.l.b16 %v208
    %v576 = vunpack.c.h.b16 %v208
    %v577 = vunpack.c.l.b16 %v209
    %v578 = vunpack.c.h.b16 %v209
    %v579 = vunpack.c.l.b16 %v210
    %v580 = vunpack.c.h.b16 %v210
    %v581 = vunpack.c.l.b16 %v211
    %v582 = vunpack.c.h.b16 %v211
    %v583 = vunpack.c.l.b16 %v212
    %v584 = vunpack.c.h.b16 %v212
    %v585 = vunpack.c.l.b16 %v213
    %v586 = vunpack.c.h.b16 %v213
    %v587 = vunpack.c.l.b16 %v214
    %v588 = vunpack.c.h.b16 %v214
    %v589 = vunpack.c.l.b16 %v215
    %v590 = vunpack.c.h.b16 %v215
    %v591 = vunpack.c.l.b16 %v216
    %v592 = vunpack.c.h.b16 %v216
    %v593 = vunpack.c.l.b16 %v217
    %v594 = vunpack.c.h.b16 %v217
    %v595 = vunpack.c.l.b16 %v218
    %v596 = vunpack.c.h.b16 %v218
    %v597 = vunpack.c.l.b16 %v219
    %v598 = vunpack.c.h.b16 %v219
    %v599 = vunpack.c.l.b16 %v220
    %v600 = vunpack.c.h.b16 %v220
    %v601 = vunpack.c.l.b16 %v221
    %v602 = vunpack.c.h.b16 %v221
    %v603 = vunpack.c.l.b16 %v222
    %v604 = vunpack.c.h.b16 %v222
    %v605 = vunpack.c.l.b16 %v223
    %v606 = vunpack.c.h.b16 %v223
    %v607 = vunpack.c.l.b16 %v224
    %v608 = vunpack.c.h.b16 %v224
    %v609 = vunpack.c.l.b16 %v225
    %v610 = vunpack.c.h.b16 %v225
    %v611 = vunpack.c.l.b16 %v226
    %v612 = vunpack.c.h.b16 %v226
    %v613 = vunpack.c.l.b16 %v227
    %v614 = vunpack.c.h.b16 %v227
    %v615 = vunpack.c.l.b16 %v228
    %v616 = vunpack.c.h.b16 %v228
    %v617 = vunpack.c.l.b16 %v229
    %v618 = vunpack.c.h.b16 %v229
    %v619 = vunpack.c.l.b16 %v230
    %v620 = vunpack.c.h.b16 %v230
    %v621 = vunpack.c.l.b16 %v231
    %v622 = vunpack.c.h.b16 %v231
    %v623 = vunpack.c.l.b16 %v232
    %v624 = vunpack.c.h.b16 %v232
    %v625 = vunpack.c.l.b16 %v233
    %v626 = vunpack.c.h.b16 %v233
    %v627 = vunpack.c.l.b16 %v234
    %v628 = vunpack.c.h.b16 %v234
    %v629 = vunpack.c.l.b16 %v235
    %v630 = vunpack.c.h.b16 %v235
    %v631 = vunpack.c.l.b16 %v236
    %v632 = vunpack.c.h.b16 %v236
    %v633 = vpack.c.b16 %v379, %v377
    %v634 = vpack.c.b16 %v380, %v378
    %v635 = vpack.c.b16 %v383, %v381
    %v636 = vpack.c.b16 %v384, %v382
    %v637 = vpack.c.b16 %v387, %v385
    %v638 = vpack.c.b16 %v388, %v386
    %v639 = vpack.c.b16 %v391, %v389
    %v640 = vpack.c.b16 %v392, %v390
    %v641 = vpack.c.b16 %v395, %v393
    %v642 = vpack.c.b16 %v396, %v394
    %v643 = vpack.c.b16 %v399, %v397
    %v644 = vpack.c.b16 %v400, %v398
    %v645 = vpack.c.b16 %v403, %v401
    %v646 = vpack.c.b16 %v404, %v402
    %v647 = vpack.c.b16 %v407, %v405
    %v648 = vpack.c.b16 %v408, %v406
    %v649 = vpack.c.b16 %v411, %v409
    %v650 = vpack.c.b16 %v412, %v410
    %v651 = vpack.c.b16 %v415, %v413
    %v652 = vpack.c.b16 %v416, %v414
    %v653 = vpack.c.b16 %v419, %v417
    %v654 = vpack.c.b16 %v420, %v418
    %v655 = vpack.c.b16 %v423, %v421
    %v656 = vpack.c.b16 %v424, %v422
    %v657 = vpack.c.b16 %v427, %v425
    %v658 = vpack.c.b16 %v428, %v426
    %v659 = vpack.c.b16 %v431, %v429
    %v660 = vpack.c.b16 %v432, %v430
    %v661 = vpack.c.b16 %v435, %v433
    %v662 = vpack.c.b16 %v436, %v434
    %v663 = vpack.c.b16 %v439, %v437
    %v664 = vpack.c.b16 %v440, %v438
    %v665 = vpack.c.b16 %v443, %v441
    %v666 = vpack.c.b16 %v444, %v442
    %v667 = vpack.c.b16 %v447, %v445
    %v668 = vpack.c.b16 %v448, %v446
    %v669 = vpack.c.b16 %v451, %v449
    %v670 = vpack.c.b16 %v452, %v450
    %v671 = vpack.c.b16 %v455, %v453
    %v672 = vpack.c.b16 %v456, %v454
    %v673 = vpack.c.b16 %v459, %v457
    %v674 = vpack.c.b16 %v460, %v458
    %v675 = vpack.c.b16 %v463, %v461
    %v676 = vpack.c.b16 %v464, %v462
    %v677 = vpack.c.b16 %v467, %v465
    %v678 = vpack.c.b16 %v468, %v466
    %v679 = vpack.c.b16 %v471, %v469
    %v680 = vpack.c.b16 %v472, %v470
    %v681 = vpack.c.b16 %v475, %v473
    %v682 = vpack.c.b16 %v476, %v474
    %v683 = vpack.c.b16 %v479, %v477
    %v684 = vpack.c.b16 %v480, %v478
    %v685 = vpack.c.b16 %v483, %v481
    %v686 = vpack.c.b16 %v484, %v482
    %v687 = vpack.c.b16 %v487, %v485
    %v688 = vpack.c.b16 %v488, %v486
    %v689 = vpack.c.b16 %v491, %v489
    %v690 = vpack.c.b16 %v492, %v490
    %v691 = vpack.c.b16 %v495, %v493
    %v692 = vpack.c.b16 %v496, %v494
    %v693 = vpack.c.b16 %v499, %v497
    %v694 = vpack.c.b16 %v500, %v498
    %v695 = vpack.c.b16 %v503, %v501
    %v696 = vpack.c.b16 %v504, %v502
    %v697 = vpack.c.b16 %v507, %v505
    %v698 = vpack.c.b16 %v508, %v506
    %v699 = vpack.c.b16 %v511, %v509
    %v700 = vpack.c.b16 %v512, %v510
    %v701 = vpack.c.b16 %v515, %v513
    %v702 = vpack.c.b16 %v516, %v514
    %v703 = vpack.c.b16 %v519, %v517
    %v704 = vpack.c.b16 %v520, %v518
    %v705 = vpack.c.b16 %v523, %v521
    %v706 = vpack.c.b16 %v524, %v522
    %v707 = vpack.c.b16 %v527, %v525
    %v708 = vpack.c.b16 %v528, %v526
    %v709 = vpack.c.b16 %v531, %v529
    %v710 = vpack.c.b16 %v532, %v530
    %v711 = vpack.c.b16 %v535, %v533
    %v712 = vpack.c.b16 %v536, %v534
    %v713 = vpack.c.b16 %v539, %v537
    %v714 = vpack.c.b16 %v540, %v538
    %v715 = vpack.c.b16 %v543, %v541
    %v716 = vpack.c.b16 %v544, %v542
    %v717 = vpack.c.b16 %v547, %v545
    %v718 = vpack.c.b16 %v548, %v546
    %v719 = vpack.c.b16 %v551, %v549
    %v720 = vpack.c.b16 %v552, %v550
    %v721 = vpack.c.b16 %v555, %v553
    %v722 = vpack.c.b16 %v556, %v554
    %v723 = vpack.c.b16 %v559, %v557
    %v724 = vpack.c.b16 %v560, %v558
    %v725 = vpack.c.b16 %v563, %v561
    %v726 = vpack.c.b16 %v564, %v562
    %v727 = vpack.c.b16 %v567, %v565
    %v728 = vpack.c.b16 %v568, %v566
    %v729 = vpack.c.b16 %v571, %v569
    %v730 = vpack.c.b16 %v572, %v570
    %v731 = vpack.c.b16 %v575, %v573
    %v732 = vpack.c.b16 %v576, %v574
    %v733 = vpack.c.b16 %v579, %v577
    %v734 = vpack.c.b16 %v580, %v578
    %v735 = vpack.c.b16 %v583, %v581
    %v736 = vpack.c.b16 %v584, %v582
    %v737 = vpack.c.b16 %v587, %v585
    %v738 = vpack.c.b16 %v588, %v586
    %v739 = vpack.c.b16 %v591, %v589
    %v740 = vpack.c.b16 %v592, %v590
    %v741 = vpack.c.b16 %v595, %v593
    %v742 = vpack.c.b16 %v596, %v594
    %v743 = vpack.c.b16 %v599, %v597
    %v744 = vpack.c.b16 %v600, %v598
    %v745 = vpack.c.b16 %v603, %v601
    %v746 = vpack.c.b16 %v604, %v602
    %v747 = vpack.c.b16 %v607, %v605
    %v748 = vpack.c.b16 %v608, %v606
    %v749 = vpack.c.b16 %v611, %v609
    %v750 = vpack.c.b16 %v612, %v610
    %v751 = vpack.c.b16 %v615, %v613
    %v752 = vpack.c.b16 %v616, %v614
    %v753 = vpack.c.b16 %v619, %v617
    %v754 = vpack.c.b16 %v620, %v618
    %v755 = vpack.c.b16 %v623, %v621
    %v756 = vpack.c.b16 %v624, %v622
    %v757 = vpack.c.b16 %v627, %v625
    %v758 = vpack.c.b16 %v628, %v626
    %v759 = vpack.c.b16 %v631, %v629
    %v760 = vpack.c.b16 %v632, %v630
    %889 = vmatprep.subr.bf16.mxu0 %v634
    %890 = vmatpush1.bf16.msra.mxu0 %v633
    %891 = vmatprep.subr.bf16.mxu0 %v636
    %892 = vmatpush1.bf16.msra.mxu0 %v635
    %893 = vmatprep.subr.bf16.mxu0 %v638
    %894 = vmatpush1.bf16.msra.mxu0 %v637
    %895 = vmatprep.subr.bf16.mxu0 %v640
    %896 = vmatpush1.bf16.msra.mxu0 %v639
    %897 = vmatprep.subr.bf16.mxu0 %v642
    %898 = vmatpush1.bf16.msra.mxu0 %v641
    %899 = vmatprep.subr.bf16.mxu0 %v644
    %900 = vmatpush1.bf16.msra.mxu0 %v643
    %901 = vmatprep.subr.bf16.mxu0 %v646
    %902 = vmatpush1.bf16.msra.mxu0 %v645
    %903 = vmatprep.subr.bf16.mxu0 %v648
    %904 = vmatpush1.bf16.msra.mxu0 %v647
    %905 = vmatprep.subr.bf16.mxu0 %v650
    %906 = vmatpush1.bf16.msra.mxu0 %v649
    %907 = vmatprep.subr.bf16.mxu0 %v652
    %908 = vmatpush1.bf16.msra.mxu0 %v651
    %909 = vmatprep.subr.bf16.mxu0 %v654
    %910 = vmatpush1.bf16.msra.mxu0 %v653
    %911 = vmatprep.subr.bf16.mxu0 %v656
    %912 = vmatpush1.bf16.msra.mxu0 %v655
    %913 = vmatprep.subr.bf16.mxu0 %v658
    %914 = vmatpush1.bf16.msra.mxu0 %v657
    %915 = vmatprep.subr.bf16.mxu0 %v660
    %916 = vmatpush1.bf16.msra.mxu0 %v659
    %917 = vmatprep.subr.bf16.mxu0 %v662
    %918 = vmatpush1.bf16.msra.mxu0 %v661
    %919 = vmatprep.subr.bf16.mxu0 %v664
    %920 = vmatpush1.bf16.msra.mxu0 %v663
    %921 = vmatprep.mubr.bf16.mxu0 %v102
    %922 = vmatmul.mubr.bf16.gmra.mrb[0].mxu0 %v101
    %v923 = vpop.f32.mrb[0].mxu0
    %v924 = vadd.f32 %v242, %v923
    %v925 = vpop.f32.mrb[0].mxu0
    %v926 = vadd.f32 %v246, %v925
    %v927 = vpop.f32.mrb[0].mxu0
    %v928 = vpop.f32.mrb[0].mxu0
    %929 = vdwg.mxu0
    %930 = vmatprep.subr.bf16.mxu0 %v666
    %931 = vmatpush1.bf16.msra.mxu0 %v665
    %932 = vmatprep.subr.bf16.mxu0 %v668
    %933 = vmatpush1.bf16.msra.mxu0 %v667
    %934 = vmatprep.subr.bf16.mxu0 %v670
    %935 = vmatpush1.bf16.msra.mxu0 %v669
    %936 = vmatprep.subr.bf16.mxu0 %v672
    %937 = vmatpush1.bf16.msra.mxu0 %v671
    %938 = vmatprep.subr.bf16.mxu0 %v674
    %939 = vmatpush1.bf16.msra.mxu0 %v673
    %940 = vmatprep.subr.bf16.mxu0 %v676
    %941 = vmatpush1.bf16.msra.mxu0 %v675
    %942 = vmatprep.subr.bf16.mxu0 %v678
    %943 = vmatpush1.bf16.msra.mxu0 %v677
    %944 = vmatprep.subr.bf16.mxu0 %v680
    %945 = vmatpush1.bf16.msra.mxu0 %v679
    %946 = vmatprep.subr.bf16.mxu0 %v682
    %947 = vmatpush1.bf16.msra.mxu0 %v681
    %948 = vmatprep.subr.bf16.mxu0 %v684
    %949 = vmatpush1.bf16.msra.mxu0 %v683
    %950 = vmatprep.subr.bf16.mxu0 %v686
    %951 = vmatpush1.bf16.msra.mxu0 %v685
    %952 = vmatprep.subr.bf16.mxu0 %v688
    %953 = vmatpush1.bf16.msra.mxu0 %v687
    %954 = vmatprep.subr.bf16.mxu0 %v690
    %955 = vmatpush1.bf16.msra.mxu0 %v689
    %956 = vmatprep.subr.bf16.mxu0 %v692
    %957 = vmatpush1.bf16.msra.mxu0 %v691
    %958 = vmatprep.subr.bf16.mxu0 %v694
    %959 = vmatpush1.bf16.msra.mxu0 %v693
    %960 = vmatprep.subr.bf16.mxu0 %v696
    %961 = vmatpush1.bf16.msra.mxu0 %v695
    %962 = vmatprep.mubr.bf16.mxu0 %v104
    %963 = vmatmul.mubr.bf16.gmra.mrb[0].mxu0 %v103
    %v964 = vpop.f32.mrb[0].mxu0
    %v965 = vadd.f32 %v924, %v964
    %v966 = vpop.f32.mrb[0].mxu0
    %v967 = vadd.f32 %v926, %v966
    %v968 = vpop.f32.mrb[0].mxu0
    %v969 = vpop.f32.mrb[0].mxu0
    %970 = vdwg.mxu0
    %971 = vmatprep.subr.bf16.mxu0 %v698
    %972 = vmatpush1.bf16.msra.mxu0 %v697
    %973 = vmatprep.subr.bf16.mxu0 %v700
    %974 = vmatpush1.bf16.msra.mxu0 %v699
    %975 = vmatprep.subr.bf16.mxu0 %v702
    %976 = vmatpush1.bf16.msra.mxu0 %v701
    %977 = vmatprep.subr.bf16.mxu0 %v704
    %978 = vmatpush1.bf16.msra.mxu0 %v703
    %979 = vmatprep.subr.bf16.mxu0 %v706
    %980 = vmatpush1.bf16.msra.mxu0 %v705
    %981 = vmatprep.subr.bf16.mxu0 %v708
    %982 = vmatpush1.bf16.msra.mxu0 %v707
    %983 = vmatprep.subr.bf16.mxu0 %v710
    %984 = vmatpush1.bf16.msra.mxu0 %v709
    %985 = vmatprep.subr.bf16.mxu0 %v712
    %986 = vmatpush1.bf16.msra.mxu0 %v711
    %987 = vmatprep.subr.bf16.mxu0 %v714
    %988 = vmatpush1.bf16.msra.mxu0 %v713
    %989 = vmatprep.subr.bf16.mxu0 %v716
    %990 = vmatpush1.bf16.msra.mxu0 %v715
    %991 = vmatprep.subr.bf16.mxu0 %v718
    %992 = vmatpush1.bf16.msra.mxu0 %v717
    %993 = vmatprep.subr.bf16.mxu0 %v720
    %994 = vmatpush1.bf16.msra.mxu0 %v719
    %995 = vmatprep.subr.bf16.mxu0 %v722
    %996 = vmatpush1.bf16.msra.mxu0 %v721
    %997 = vmatprep.subr.bf16.mxu0 %v724
    %998 = vmatpush1.bf16.msra.mxu0 %v723
    %999 = vmatprep.subr.bf16.mxu0 %v726
    %1000 = vmatpush1.bf16.msra.mxu0 %v725
    %1001 = vmatprep.subr.bf16.mxu0 %v728
    %1002 = vmatpush1.bf16.msra.mxu0 %v727
    %1003 = vmatprep.mubr.bf16.mxu0 %v106
    %1004 = vmatmul.mubr.bf16.gmra.mrb[0].mxu0 %v105
    %v1005 = vpop.f32.mrb[0].mxu0
    %v1006 = vadd.f32 %v965, %v1005
    %v1007 = vpop.f32.mrb[0].mxu0
    %v1008 = vadd.f32 %v967, %v1007
    %v1009 = vpop.f32.mrb[0].mxu0
    %v1010 = vpop.f32.mrb[0].mxu0
    %1011 = vdwg.mxu0
    %1012 = vmatprep.subr.bf16.mxu0 %v730
    %1013 = vmatpush1.bf16.msra.mxu0 %v729
    %1014 = vmatprep.subr.bf16.mxu0 %v732
    %1015 = vmatpush1.bf16.msra.mxu0 %v731
    %1016 = vmatprep.subr.bf16.mxu0 %v734
    %1017 = vmatpush1.bf16.msra.mxu0 %v733
    %1018 = vmatprep.subr.bf16.mxu0 %v736
    %1019 = vmatpush1.bf16.msra.mxu0 %v735
    %1020 = vmatprep.subr.bf16.mxu0 %v738
    %1021 = vmatpush1.bf16.msra.mxu0 %v737
    %1022 = vmatprep.subr.bf16.mxu0 %v740
    %1023 = vmatpush1.bf16.msra.mxu0 %v739
    %1024 = vmatprep.subr.bf16.mxu0 %v742
    %1025 = vmatpush1.bf16.msra.mxu0 %v741
    %1026 = vmatprep.subr.bf16.mxu0 %v744
    %1027 = vmatpush1.bf16.msra.mxu0 %v743
    %1028 = vmatprep.subr.bf16.mxu0 %v746
    %1029 = vmatpush1.bf16.msra.mxu0 %v745
    %1030 = vmatprep.subr.bf16.mxu0 %v748
    %1031 = vmatpush1.bf16.msra.mxu0 %v747
    %1032 = vmatprep.subr.bf16.mxu0 %v750
    %1033 = vmatpush1.bf16.msra.mxu0 %v749
    %1034 = vmatprep.subr.bf16.mxu0 %v752
    %1035 = vmatpush1.bf16.msra.mxu0 %v751
    %1036 = vmatprep.subr.bf16.mxu0 %v754
    %1037 = vmatpush1.bf16.msra.mxu0 %v753
    %1038 = vmatprep.subr.bf16.mxu0 %v756
    %1039 = vmatpush1.bf16.msra.mxu0 %v755
    %1040 = vmatprep.subr.bf16.mxu0 %v758
    %1041 = vmatpush1.bf16.msra.mxu0 %v757
    %1042 = vmatprep.subr.bf16.mxu0 %v760
    %1043 = vmatpush1.bf16.msra.mxu0 %v759
    %1044 = vmatprep.mubr.bf16.mxu0 %v108
    %1045 = vmatmul.mubr.bf16.gmra.mrb[0].mxu0 %v107
    %v1046 = vpop.f32.mrb[0].mxu0
    %v1047 = vadd.f32 %v1006, %v1046
    %v1048 = vpop.f32.mrb[0].mxu0
    %v1049 = vadd.f32 %v1008, %v1048
    %v1050 = vpop.f32.mrb[0].mxu0
    %v1051 = vpop.f32.mrb[0].mxu0
    %1052 = vdwg.mxu0
    %vm1053 = vcmp.ge.f32.partialorder %v1047, 0.0
    %vm1054 = vcmp.ge.f32.partialorder %v1049, 0.0
    %v1055 = vmul.f32 %v1047, 0.01
    %v1056 = vmul.f32 %v1049, 0.01
    %v1057 = vsel %vm1053, %v1047, %v1055
    %v1058 = vsel %vm1054, %v1049, %v1056
    %v1059 = vpack.c.bf16 %v1057, %v1057
    %v1060 = vpack.c.bf16 %v1058, %v1058
    %v1061 = vld [vmem:[%s3] sm:$0xf]
    %v1062 = vld [vmem:[%s3 + $0x4] sm:$0xf]
    %v1063 = vld [vmem:[%s3 + $0x8] sm:$0xf]
    %v1064 = vld [vmem:[%s3 + $0xc] sm:$0xf]
    %v1065 = vld [vmem:[%s3 + $0x10] sm:$0xf]
    %v1066 = vld [vmem:[%s3 + $0x14] sm:$0xf]
    %v1067 = vld [vmem:[%s3 + $0x18] sm:$0xf]
    %v1068 = vld [vmem:[%s3 + $0x1c] sm:$0xf]
    %v1069 = vld [vmem:[%s3 + $0x20] sm:$0xf]
    %v1070 = vld [vmem:[%s3 + $0x24] sm:$0xf]
    %v1071 = vld [vmem:[%s3 + $0x28] sm:$0xf]
    %v1072 = vld [vmem:[%s3 + $0x2c] sm:$0xf]
    %v1073 = vld [vmem:[%s3 + $0x30] sm:$0xf]
    %v1074 = vld [vmem:[%s3 + $0x34] sm:$0xf]
    %v1075 = vld [vmem:[%s3 + $0x38] sm:$0xf]
    %v1076 = vld [vmem:[%s3 + $0x3c] sm:$0xf]
    %v1077 = vld [vmem:[%s3 + $0x40] sm:$0xf]
    %v1078 = vld [vmem:[%s3 + $0x44] sm:$0xf]
    %v1079 = vld [vmem:[%s3 + $0x48] sm:$0xf]
    %v1080 = vld [vmem:[%s3 + $0x4c] sm:$0xf]
    %v1081 = vld [vmem:[%s3 + $0x50] sm:$0xf]
    %v1082 = vld [vmem:[%s3 + $0x54] sm:$0xf]
    %v1083 = vld [vmem:[%s3 + $0x58] sm:$0xf]
    %v1084 = vld [vmem:[%s3 + $0x5c] sm:$0xf]
    %v1085 = vld [vmem:[%s3 + $0x60] sm:$0xf]
    %v1086 = vld [vmem:[%s3 + $0x64] sm:$0xf]
    %v1087 = vld [vmem:[%s3 + $0x68] sm:$0xf]
    %v1088 = vld [vmem:[%s3 + $0x6c] sm:$0xf]
    %v1089 = vld [vmem:[%s3 + $0x70] sm:$0xf]
    %v1090 = vld [vmem:[%s3 + $0x74] sm:$0xf]
    %v1091 = vld [vmem:[%s3 + $0x78] sm:$0xf]
    %v1092 = vld [vmem:[%s3 + $0x7c] sm:$0xf]
    %v1093 = vld [vmem:[%s4] sm:$0x1]
    %v1095 = vlaneseq
    %v1096 = vshrl.u32 %v1095, 7
    %v1097 = vsub.s32 0, %v1096
    %v1098 = vrot.slane %v1093, %v1097
    %v1132 = vunpack.c.l.b16 %v1061
    %v1133 = vunpack.c.l.b16 %v1062
    %v1134 = vunpack.c.l.b16 %v1063
    %v1135 = vunpack.c.l.b16 %v1064
    %v1136 = vunpack.c.l.b16 %v1065
    %v1137 = vunpack.c.l.b16 %v1066
    %v1138 = vunpack.c.l.b16 %v1067
    %v1139 = vunpack.c.l.b16 %v1068
    %v1140 = vunpack.c.l.b16 %v1069
    %v1141 = vunpack.c.l.b16 %v1070
    %v1142 = vunpack.c.l.b16 %v1071
    %v1143 = vunpack.c.l.b16 %v1072
    %v1144 = vunpack.c.l.b16 %v1073
    %v1145 = vunpack.c.l.b16 %v1074
    %v1146 = vunpack.c.l.b16 %v1075
    %v1147 = vunpack.c.l.b16 %v1076
    %v1148 = vunpack.c.l.b16 %v1077
    %v1149 = vunpack.c.l.b16 %v1078
    %v1150 = vunpack.c.l.b16 %v1079
    %v1151 = vunpack.c.l.b16 %v1080
    %v1152 = vunpack.c.l.b16 %v1081
    %v1153 = vunpack.c.l.b16 %v1082
    %v1154 = vunpack.c.l.b16 %v1083
    %v1155 = vunpack.c.l.b16 %v1084
    %v1156 = vunpack.c.l.b16 %v1085
    %v1157 = vunpack.c.l.b16 %v1086
    %v1158 = vunpack.c.l.b16 %v1087
    %v1159 = vunpack.c.l.b16 %v1088
    %v1160 = vunpack.c.l.b16 %v1089
    %v1161 = vunpack.c.l.b16 %v1090
    %v1162 = vunpack.c.l.b16 %v1091
    %v1163 = vunpack.c.l.b16 %v1092
    %v1164 = vpack.c.b16 %v1133, %v1132
    %v1165 = vpack.c.b16 %v1135, %v1134
    %v1166 = vpack.c.b16 %v1137, %v1136
    %v1167 = vpack.c.b16 %v1139, %v1138
    %v1168 = vpack.c.b16 %v1141, %v1140
    %v1169 = vpack.c.b16 %v1143, %v1142
    %v1170 = vpack.c.b16 %v1145, %v1144
    %v1171 = vpack.c.b16 %v1147, %v1146
    %v1172 = vpack.c.b16 %v1149, %v1148
    %v1173 = vpack.c.b16 %v1151, %v1150
    %v1174 = vpack.c.b16 %v1153, %v1152
    %v1175 = vpack.c.b16 %v1155, %v1154
    %v1176 = vpack.c.b16 %v1157, %v1156
    %v1177 = vpack.c.b16 %v1159, %v1158
    %v1178 = vpack.c.b16 %v1161, %v1160
    %v1179 = vpack.c.b16 %v1163, %v1162
    %1196 = vmatprep.subr.bf16.mxu0 0
    %1197 = vmatpush1.bf16.msra.mxu0 %v1164
    %1198 = vmatprep.subr.bf16.mxu0 0
    %1199 = vmatpush1.bf16.msra.mxu0 %v1165
    %1200 = vmatprep.subr.bf16.mxu0 0
    %1201 = vmatpush1.bf16.msra.mxu0 %v1166
    %1202 = vmatprep.subr.bf16.mxu0 0
    %1203 = vmatpush1.bf16.msra.mxu0 %v1167
    %1204 = vmatprep.subr.bf16.mxu0 0
    %1205 = vmatpush1.bf16.msra.mxu0 %v1168
    %1206 = vmatprep.subr.bf16.mxu0 0
    %1207 = vmatpush1.bf16.msra.mxu0 %v1169
    %1208 = vmatprep.subr.bf16.mxu0 0
    %1209 = vmatpush1.bf16.msra.mxu0 %v1170
    %1210 = vmatprep.subr.bf16.mxu0 0
    %1211 = vmatpush1.bf16.msra.mxu0 %v1171
    %1212 = vmatprep.subr.bf16.mxu0 0
    %1213 = vmatpush1.bf16.msra.mxu0 %v1172
    %1214 = vmatprep.subr.bf16.mxu0 0
    %1215 = vmatpush1.bf16.msra.mxu0 %v1173
    %1216 = vmatprep.subr.bf16.mxu0 0
    %1217 = vmatpush1.bf16.msra.mxu0 %v1174
    %1218 = vmatprep.subr.bf16.mxu0 0
    %1219 = vmatpush1.bf16.msra.mxu0 %v1175
    %1220 = vmatprep.subr.bf16.mxu0 0
    %1221 = vmatpush1.bf16.msra.mxu0 %v1176
    %1222 = vmatprep.subr.bf16.mxu0 0
    %1223 = vmatpush1.bf16.msra.mxu0 %v1177
    %1224 = vmatprep.subr.bf16.mxu0 0
    %1225 = vmatpush1.bf16.msra.mxu0 %v1178
    %1226 = vmatprep.subr.bf16.mxu0 0
    %1227 = vmatpush1.bf16.msra.mxu0 %v1179
    %1228 = vmatprep.mubr.bf16.mxu0 %v1060
    %1229 = vmatmul.mubr.bf16.gmra.mrb[0].mxu0 %v1059
    %v1230 = vpop.f32.mrb[0].mxu0
    %v1231 = vadd.f32 %v1098, %v1230
    %v1232 = vpop.f32.mrb[0].mxu0
    %v1233 = vpop.f32.mrb[0].mxu0
    %v1234 = vpop.f32.mrb[0].mxu0
    %1235 = vdwg.mxu0
    %vm1236 = vcmp.ge.f32.partialorder %v1231, 0.0
    %v1237 = vmul.f32 %v1231, 0.01
    %v1238 = vsel %vm1236, %v1231, %v1237
    %v1239 = vpack.c.bf16 %v1238, %v1238
    %v1240 = vld [vmem:[%s5] sm:$0xf]
    %v1241 = vld [vmem:[%s5 + $0x4] sm:$0xf]
    %v1242 = vld [vmem:[%s5 + $0x8] sm:$0xf]
    %v1243 = vld [vmem:[%s5 + $0xc] sm:$0xf]
    %v1244 = vld [vmem:[%s5 + $0x10] sm:$0xf]
    %v1245 = vld [vmem:[%s5 + $0x14] sm:$0xf]
    %v1246 = vld [vmem:[%s5 + $0x18] sm:$0xf]
    %v1247 = vld [vmem:[%s5 + $0x1c] sm:$0xf]
    %v1248 = vld [vmem:[%s5 + $0x20] sm:$0xf]
    %v1249 = vld [vmem:[%s5 + $0x24] sm:$0xf]
    %v1250 = vld [vmem:[%s5 + $0x28] sm:$0xf]
    %v1251 = vld [vmem:[%s5 + $0x2c] sm:$0xf]
    %v1252 = vld [vmem:[%s5 + $0x30] sm:$0xf]
    %v1253 = vld [vmem:[%s5 + $0x34] sm:$0xf]
    %v1254 = vld [vmem:[%s5 + $0x38] sm:$0xf]
    %v1255 = vld [vmem:[%s5 + $0x3c] sm:$0xf]
    %v1256 = vld [vmem:[%s6] sm:$0x1]
    %v1258 = vlaneseq
    %v1259 = vshrl.u32 %v1258, 7
    %v1260 = vsub.s32 0, %v1259
    %v1261 = vrot.slane %v1256, %v1260
    %v1279 = vunpack.c.l.b16 %v1240
    %v1280 = vunpack.c.l.b16 %v1241
    %v1281 = vunpack.c.l.b16 %v1242
    %v1282 = vunpack.c.l.b16 %v1243
    %v1283 = vunpack.c.l.b16 %v1244
    %v1284 = vunpack.c.l.b16 %v1245
    %v1285 = vunpack.c.l.b16 %v1246
    %v1286 = vunpack.c.l.b16 %v1247
    %v1287 = vunpack.c.l.b16 %v1248
    %v1288 = vunpack.c.l.b16 %v1249
    %v1289 = vunpack.c.l.b16 %v1250
    %v1290 = vunpack.c.l.b16 %v1251
    %v1291 = vunpack.c.l.b16 %v1252
    %v1292 = vunpack.c.l.b16 %v1253
    %v1293 = vunpack.c.l.b16 %v1254
    %v1294 = vunpack.c.l.b16 %v1255
    %v1295 = vpack.c.b16 %v1280, %v1279
    %v1296 = vpack.c.b16 %v1282, %v1281
    %v1297 = vpack.c.b16 %v1284, %v1283
    %v1298 = vpack.c.b16 %v1286, %v1285
    %v1299 = vpack.c.b16 %v1288, %v1287
    %v1300 = vpack.c.b16 %v1290, %v1289
    %v1301 = vpack.c.b16 %v1292, %v1291
    %v1302 = vpack.c.b16 %v1294, %v1293
    %1311 = vmatprep.subr.bf16.mxu0 0
    %1312 = vmatpush1.bf16.msra.mxu0 %v1295
    %1313 = vmatprep.subr.bf16.mxu0 0
    %1314 = vmatpush1.bf16.msra.mxu0 %v1296
    %1315 = vmatprep.subr.bf16.mxu0 0
    %1316 = vmatpush1.bf16.msra.mxu0 %v1297
    %1317 = vmatprep.subr.bf16.mxu0 0
    %1318 = vmatpush1.bf16.msra.mxu0 %v1298
    %1319 = vmatprep.subr.bf16.mxu0 0
    %1320 = vmatpush1.bf16.msra.mxu0 %v1299
    %1321 = vmatprep.subr.bf16.mxu0 0
    %1322 = vmatpush1.bf16.msra.mxu0 %v1300
    %1323 = vmatprep.subr.bf16.mxu0 0
    %1324 = vmatpush1.bf16.msra.mxu0 %v1301
    %1325 = vmatprep.subr.bf16.mxu0 0
    %1326 = vmatpush1.bf16.msra.mxu0 %v1302
    %1327 = vmatprep.subr.bf16.mxu0 0
    %1328 = vmatpush1.bf16.msra.mxu0 0
    %1329 = vmatprep.subr.bf16.mxu0 0
    %1330 = vmatpush1.bf16.msra.mxu0 0
    %1331 = vmatprep.subr.bf16.mxu0 0
    %1332 = vmatpush1.bf16.msra.mxu0 0
    %1333 = vmatprep.subr.bf16.mxu0 0
    %1334 = vmatpush1.bf16.msra.mxu0 0
    %1335 = vmatprep.subr.bf16.mxu0 0
    %1336 = vmatpush1.bf16.msra.mxu0 0
    %1337 = vmatprep.subr.bf16.mxu0 0
    %1338 = vmatpush1.bf16.msra.mxu0 0
    %1339 = vmatprep.subr.bf16.mxu0 0
    %1340 = vmatpush1.bf16.msra.mxu0 0
    %1341 = vmatprep.subr.bf16.mxu0 0
    %1342 = vmatpush1.bf16.msra.mxu0 0
    %1343 = vmatprep.mubr.bf16.mxu0 0
    %1344 = vmatmul.mubr.bf16.gmra.mrb[0].mxu0 %v1239
    %v1345 = vpop.f32.mrb[0].mxu0
    %v1346 = vadd.f32 %v1261, %v1345
    %v1347 = vpop.f32.mrb[0].mxu0
    %v1348 = vpop.f32.mrb[0].mxu0
    %v1349 = vpop.f32.mrb[0].mxu0
    %1350 = vdwg.mxu0
    %vm1351 = vcmp.ge.f32.partialorder %v1346, 0.0
    %v1352 = vmul.f32 %v1346, 0.01
    %v1353 = vsel %vm1351, %v1346, %v1352
    %v1354 = vpack.c.bf16 %v1353, %v1353
    %v1355 = vld [vmem:[%s7] sm:$0xf]
    %v1356 = vld [vmem:[%s7 + $0x4] sm:$0xf]
    %v1357 = vld [vmem:[%s7 + $0x8] sm:$0xf]
    %v1358 = vld [vmem:[%s7 + $0xc] sm:$0xf]
    %v1359 = vld [vmem:[%s7 + $0x10] sm:$0xf]
    %v1360 = vld [vmem:[%s7 + $0x14] sm:$0xf]
    %v1361 = vld [vmem:[%s7 + $0x18] sm:$0xf]
    %v1362 = vld [vmem:[%s7 + $0x1c] sm:$0xf]
    %v1363 = vld [vmem:[%s8] sm:$0x1]
    %v1365 = vlaneseq
    %v1366 = vshrl.u32 %v1365, 7
    %v1367 = vsub.s32 0, %v1366
    %v1368 = vrot.slane %v1363, %v1367
    %v1378 = vunpack.c.l.b16 %v1355
    %v1379 = vunpack.c.l.b16 %v1356
    %v1380 = vunpack.c.l.b16 %v1357
    %v1381 = vunpack.c.l.b16 %v1358
    %v1382 = vunpack.c.l.b16 %v1359
    %v1383 = vunpack.c.l.b16 %v1360
    %v1384 = vunpack.c.l.b16 %v1361
    %v1385 = vunpack.c.l.b16 %v1362
    %v1386 = vpack.c.b16 %v1379, %v1378
    %v1387 = vpack.c.b16 %v1381, %v1380
    %v1388 = vpack.c.b16 %v1383, %v1382
    %v1389 = vpack.c.b16 %v1385, %v1384
    %vm1394 = vcmask 523264
    %v1396 = vsel %vm1394, %v1354, 0
    %1398 = vmatprep.subr.bf16.mxu0 0
    %1399 = vmatpush1.bf16.msra.mxu0 %v1386
    %1400 = vmatprep.subr.bf16.mxu0 0
    %1401 = vmatpush1.bf16.msra.mxu0 %v1387
    %1402 = vmatprep.subr.bf16.mxu0 0
    %1403 = vmatpush1.bf16.msra.mxu0 %v1388
    %1404 = vmatprep.subr.bf16.mxu0 0
    %1405 = vmatpush1.bf16.msra.mxu0 %v1389
    %1406 = vmatprep.subr.bf16.mxu0 0
    %1407 = vmatpush1.bf16.msra.mxu0 0
    %1408 = vmatprep.subr.bf16.mxu0 0
    %1409 = vmatpush1.bf16.msra.mxu0 0
    %1410 = vmatprep.subr.bf16.mxu0 0
    %1411 = vmatpush1.bf16.msra.mxu0 0
    %1412 = vmatprep.subr.bf16.mxu0 0
    %1413 = vmatpush1.bf16.msra.mxu0 0
    %1414 = vmatprep.subr.bf16.mxu0 0
    %1415 = vmatpush1.bf16.msra.mxu0 0
    %1416 = vmatprep.subr.bf16.mxu0 0
    %1417 = vmatpush1.bf16.msra.mxu0 0
    %1418 = vmatprep.subr.bf16.mxu0 0
    %1419 = vmatpush1.bf16.msra.mxu0 0
    %1420 = vmatprep.subr.bf16.mxu0 0
    %1421 = vmatpush1.bf16.msra.mxu0 0
    %1422 = vmatprep.subr.bf16.mxu0 0
    %1423 = vmatpush1.bf16.msra.mxu0 0
    %1424 = vmatprep.subr.bf16.mxu0 0
    %1425 = vmatpush1.bf16.msra.mxu0 0
    %1426 = vmatprep.subr.bf16.mxu0 0
    %1427 = vmatpush1.bf16.msra.mxu0 0
    %1428 = vmatprep.subr.bf16.mxu0 0
    %1429 = vmatpush1.bf16.msra.mxu0 0
    %1430 = vmatprep.mubr.bf16.mxu0 0
    %1431 = vmatmul.mubr.bf16.gmra.mrb[0].mxu0 %v1396
    %v1432 = vpop.f32.mrb[0].mxu0
    %v1433 = vadd.f32 %v1368, %v1432
    %v1434 = vpop.f32.mrb[0].mxu0
    %v1435 = vpop.f32.mrb[0].mxu0
    %v1436 = vpop.f32.mrb[0].mxu0
    %1437 = vdwg.mxu0
    %vm1438 = vcmp.ge.f32.partialorder %v1433, 0.0
    %v1439 = vmul.f32 %v1433, 0.01
    %v1440 = vsel %vm1438, %v1433, %v1439
    %v1441 = vld [vmem:[%s9] sm:$0x1]
    %v1443 = vlaneseq
    %v1444 = vshrl.u32 %v1443, 7
    %v1445 = vsub.s32 0, %v1444
    %v1446 = vrot.slane %v1441, %v1445
    %v1448 = vmul.f32 %v1440, %v1446
    %vm1449 = vcmask 254976
    %v1450 = vsel %vm1449, %v1448, 0.0
    %1451 = vadd.xlane.f32.xlu0 %v1450
    %v1452 = vpop.xlane.xlu0 %1451
    %v1453 = vld [vmem:[#allocation2] sm:$0x1]
    %v1455 = vlaneseq
    %v1456 = vshrl.u32 %v1455, 7
    %v1457 = vsub.s32 0, %v1456
    %v1458 = vrot.slane %v1453, %v1457
    %v1460 = vadd.f32 %v1452, %v1458
    %vm1461 = vcmask 1024
    %1462 = vst.msk [vmem:[%s11] sm:$0x3] %vm1461, %v1460
    // Predicated region
    $region50: #{netd_v1_forward.1} parent=1 // pred_check
      _
    $region51: #{netd_v1_forward.1} parent=1 // pred_check_branch
      %1464 = sbr.rel (0) target = $region53
    $region52: #{netd_v1_forward.1} parent=1 // pred_region
      _
    $region53: #{netd_v1_forward.1} parent=1 // pred_fallthru
      _
    // Predicated region
    $region54: #{netd_v1_forward.1} parent=1 // pred_check
      _
    $region55: #{netd_v1_forward.1} parent=1 // pred_check_branch
      %1466 = sbr.rel (0) target = $region57
    $region56: #{netd_v1_forward.1} parent=1 // pred_region
      _
    $region57: #{netd_v1_forward.1} parent=1 // pred_fallthru
      _
    %1467 = vsyncpa [#allocation4], 1

</llo_original>
